<compile_context>
chip_gen: v5e
topology: v5e:2x2
jax: 0.10.0
libtpu: 0.0.40
codegen_flags: <defaults>
</compile_context>

<pallas_src>
import math

import jax
import jax.numpy as jnp
from jax import lax
from jax.experimental import pallas as pl
from jax.experimental.pallas import tpu as pltpu


def _round_up(x, m):
    return (x + m - 1) // m * m


# ----------------------------------------------------------------------------
# Static layout config
# ----------------------------------------------------------------------------
def make_config(input_dim, hidden_dims, output_dim, num_experts,
                gating_hidden_dim):
    dims = [input_dim] + list(hidden_dims) + [output_dim]
    L = len(dims) - 1
    E = num_experts
    gh = gating_hidden_dim
    Dout = output_dim
    ED = E * Dout

    pack_w = _round_up(max([E, gh, E * dims[1] + gh]
                           + [E * d for d in dims[1:]]), 128)
    out_w = _round_up(ED + E + 2, 128)

    R_BG2, R_BO, R_BIAS = 0, 1, 2                   # bg2 row, bo row, L bias rows
    R_WG2 = _round_up(R_BIAS + L, 8)                # (gh, E) gating layer 2
    R_SELWO = R_WG2 + _round_up(gh, 8)              # (ED, E) block-diag wo columns
    R_SEG = R_SELWO + _round_up(ED, 8)              # (ED, ED) block-ones segment sum
    slab_rows = _round_up(R_SEG + ED, 8)

    return dict(dims=dims, L=L, E=E, gh=gh, Dout=Dout, Din=input_dim, ED=ED,
                pack_w=pack_w, out_w=out_w,
                R_BG2=R_BG2, R_BO=R_BO, R_BIAS=R_BIAS, R_WG2=R_WG2,
                R_SELWO=R_SELWO, R_SEG=R_SEG, slab_rows=slab_rows)


# ----------------------------------------------------------------------------
# Pallas kernel
# ----------------------------------------------------------------------------
def make_moe_kernel(cfg):
    dims, L, E = cfg["dims"], cfg["L"], cfg["E"]
    gh, Dout, ED = cfg["gh"], cfg["Dout"], cfg["ED"]
    OUT_W = cfg["out_w"]
    R_BG2, R_BO, R_BIAS = cfg["R_BG2"], cfg["R_BO"], cfg["R_BIAS"]
    R_WG2, R_SELWO, R_SEG = cfg["R_WG2"], cfg["R_SELWO"], cfg["R_SEG"]
    we0 = E * dims[1]                       # expert part of fused layer-0 output

    def kernel(*refs):
        x_ref = refs[0]                     # (TB, Din) bf16
        w_refs = refs[1:1 + L]              # fused expert-layer weights (bf16)
        slab_ref = refs[1 + L]              # packed small params (f32)
        out_ref = refs[2 + L]               # packed lane-dense output (TB, OUT_W)

        xb = x_ref[...]
        TB = xb.shape[0]

        # ---- fused layer 0: [experts layer-0 | gating layer-1] share LHS ----
        b0 = slab_ref[R_BIAS:R_BIAS + 1, 0:we0 + gh]
        z0 = jnp.dot(xb, w_refs[0][...],
                     preferred_element_type=jnp.float32) + b0
        g = jnp.maximum(z0[:, we0:we0 + gh], 0.0)        # gating hidden (f32)
        z = z0[:, 0:we0]                                  # expert pre-activation

        # ---- remaining expert layers (block-diagonal fused, bf16 on MXU) ----
        for l in range(1, L):
            h = jnp.maximum(z, 0.0).astype(jnp.bfloat16)
            width = E * dims[l + 1]
            bl = slab_ref[R_BIAS + l:R_BIAS + l + 1, 0:width]
            z = jnp.dot(h, w_refs[l][...],
                        preferred_element_type=jnp.float32) + bl
        v_flat = z                                        # (TB, ED), P_e folded in

        # ---- gating layer 2 + exact softmax (tiny f32 matmul, no casts) -----
        wg2 = slab_ref[R_WG2:R_WG2 + gh, 0:E]
        bg2 = slab_ref[R_BG2:R_BG2 + 1, 0:E]
        logits = jnp.dot(g, wg2, preferred_element_type=jnp.float32) + bg2
        m = jnp.max(logits, axis=-1, keepdims=True)
        ex = jnp.exp(logits - m)
        gate = ex / jnp.sum(ex, axis=-1, keepdims=True)   # (TB, E), sums to 1
        # TODO(synk): expert_utilization buffer / total_forward_passes are
        # training-side stateful side effects, not returned values; omitted.

        # ---- per-expert row normalization, lane-dense segment matmul --------
        seg = slab_ref[R_SEG:R_SEG + ED, 0:ED]            # block-ones (ED, ED)
        ns = jnp.dot(v_flat * v_flat, seg,
                     preferred_element_type=jnp.float32)  # group-sum broadcast
        inv = lax.rsqrt(jnp.maximum(ns, 1e-12))           # == 1/max(||v||,1e-6)
        vn_flat = v_flat * inv                            # normalized V (TB, ED)

        # ---- cosine loss: roll + elementwise product + segmented sum --------
        # TODO(synk): reference re-normalizes (eps=1e-12) before the Gram; it is
        # redundant except for rows with ||v|| < 1e-6, so dropped here.
        if E > 1:
            acc = jnp.zeros((TB, ED), jnp.float32)
            for s in range(1, E):
                rolled = pltpu.roll(vn_flat, shift=s * Dout, axis=1)
                dots = jnp.dot(vn_flat * rolled, seg,
                               preferred_element_type=jnp.float32)
                acc = acc + jnp.abs(dots)
            cos_col = jnp.sum(acc, axis=-1, keepdims=True) * (
                1.0 / float(Dout * E * (E - 1)))          # (TB, 1) per-row loss
        else:
            cos_col = jnp.zeros((TB, 1), jnp.float32)

        # ---- gate-weighted combine + output Linear (folded selector) --------
        sel_wo = slab_ref[R_SELWO:R_SELWO + ED, 0:E]      # block-diag of wo cols
        pe = jnp.dot(vn_flat, sel_wo,
                     preferred_element_type=jnp.float32)  # (TB, E): vn_e . wo
        bo = slab_ref[R_BO:R_BO + 1, 0:1]
        final = jnp.sum(gate * pe, axis=-1, keepdims=True) + bo   # (TB, 1)

        # ---- single lane-dense packed store ---------------------------------
        parts = [vn_flat, gate, final, cos_col]
        pad = OUT_W - (ED + E + 2)
        if pad:
            parts.append(jnp.zeros((TB, pad), jnp.float32))
        out_ref[...] = jnp.concatenate(parts, axis=-1)

    return kernel


# ----------------------------------------------------------------------------
# Plain-JAX pieces with no Pallas equivalent
# ----------------------------------------------------------------------------
def build_subspace_projectors(A, num_experts):
    """Cayley transform Q = (I - S)^-1 (I + S); P_i = B_i B_i^T per expert."""
    dim = A.shape[0]
    S = A - A.T
    I = jnp.eye(dim, dtype=A.dtype)
    Q = jnp.linalg.solve(I - S, I + S)
    base, rem = divmod(dim, num_experts)
    sizes = [base + 1 if i < rem else base for i in range(num_experts)]
    starts = [0]
    for s in sizes:
        starts.append(starts[-1] + s)
    projs = []
    for i in range(num_experts):
        Bi = Q[:, starts[i]:starts[i + 1]]
        projs.append(Bi @ Bi.T)
    return jnp.stack(projs, axis=0)                       # (E, Dout, Dout)


def calculate_lambda_max_loss(v):
    """v: (batch, K, dim). QR + eigvalsh -> plain jnp.linalg (no Pallas)."""
    x = jnp.transpose(v, (1, 2, 0))                       # (K, dim, batch)
    nrm = jnp.maximum(jnp.sqrt(jnp.sum(x * x, axis=1, keepdims=True)), 1e-12)
    x = x / nrm
    eps = 1e-3
    Q, R = jnp.linalg.qr(x, mode="reduced")
    r_diag = jnp.abs(jnp.diagonal(R, axis1=-2, axis2=-1))
    k = jnp.sum(r_diag > eps, axis=1)
    cols = jnp.arange(Q.shape[-1])
    mask = (cols[None, None, :] < k[:, None, None]).astype(Q.dtype)
    Qm = Q * mask
    projs = Qm @ jnp.swapaxes(Qm, -2, -1)
    avg_proj = jnp.mean(projs, axis=0)
    eigvals = jnp.linalg.eigvalsh(avg_proj)
    return eigvals[-1]


# ----------------------------------------------------------------------------
# Parameter init (deterministic, torch-style uniform bounds)
# ----------------------------------------------------------------------------
def init_params(key, input_dim, hidden_dims, output_dim, num_experts,
                gating_hidden_dim):
    dims = [input_dim] + list(hidden_dims) + [output_dim]
    keys = iter(jax.random.split(key, 64))

    def lin(k, fan_in, shape):
        bound = 1.0 / math.sqrt(fan_in)
        return jax.random.uniform(k, shape, jnp.float32, -bound, bound)

    expert_ws, expert_bs = [], []
    for li in range(len(dims) - 1):
        din, dout = dims[li], dims[li + 1]
        expert_ws.append(lin(next(keys), din, (num_experts, din, dout)))
        expert_bs.append(lin(next(keys), din, (num_experts, 1, dout)))

    params = {
        "expert_ws": expert_ws,
        "expert_bs": expert_bs,
        "wg1": lin(next(keys), input_dim, (input_dim, gating_hidden_dim)),
        "bg1": lin(next(keys), input_dim, (1, gating_hidden_dim)),
        "wg2": lin(next(keys), gating_hidden_dim,
                   (gating_hidden_dim, num_experts)),
        "bg2": lin(next(keys), gating_hidden_dim, (1, num_experts)),
        "wo": lin(next(keys), output_dim, (output_dim, 1)),
        "bo": lin(next(keys), output_dim, (1, 1)),
    }

    # projection_matrix: zeros then kaiming_uniform_(a=-sqrt(5)) in the reference;
    # reproduced as deterministic uniform with the same bound.
    a = -math.sqrt(5.0)
    gain = math.sqrt(2.0 / (1.0 + a * a))
    bound = gain * math.sqrt(3.0 / output_dim)
    A = jax.random.uniform(next(keys), (output_dim, output_dim), jnp.float32,
                           -bound, bound)
    params["proj"] = build_subspace_projectors(A, num_experts)

    # TODO(synk): self.net (Linear->ReLU->Linear) is rebuilt every forward in
    # the reference but never applied to anything; omitted as dead code.
    return params


# ----------------------------------------------------------------------------
# Wrapper-side packing: fused expert weights + small-parameter slab
# ----------------------------------------------------------------------------
def _block_diag(blocks):
    rows = sum(b.shape[0] for b in blocks)
    cols = sum(b.shape[1] for b in blocks)
    out = jnp.zeros((rows, cols), blocks[0].dtype)
    r = c = 0
    for b in blocks:
        out = out.at[r:r + b.shape[0], c:c + b.shape[1]].set(b)
        r += b.shape[0]
        c += b.shape[1]
    return out


def pack_params(params, cfg):
    dims, L, E = cfg["dims"], cfg["L"], cfg["E"]
    gh, Dout, ED = cfg["gh"], cfg["Dout"], cfg["ED"]
    proj = params["proj"]

    fused_ws, fused_bs = [], []
    for l in range(L):
        blocks_w, blocks_b = [], []
        for e in range(E):
            w = params["expert_ws"][l][e]                 # (d_l, d_{l+1})
            b = params["expert_bs"][l][e]                 # (1, d_{l+1})
            if l == L - 1:                                # fold projection P_e
                w = w @ proj[e]
                b = b @ proj[e]
            blocks_w.append(w)
            blocks_b.append(b)
        if l == 0:
            # fuse gating layer-1 onto the shared-LHS layer-0 matmul
            fused_ws.append(jnp.concatenate(blocks_w + [params["wg1"]], axis=1))
            fused_bs.append(jnp.concatenate(blocks_b + [params["bg1"]], axis=1))
        else:
            fused_ws.append(_block_diag(blocks_w))
            fused_bs.append(jnp.concatenate(blocks_b, axis=1))
    fused_ws = [w.astype(jnp.bfloat16) for w in fused_ws]   # bf16 MXU operands

    # constant selectors for lane-dense segmented ops inside the kernel
    sel_wo = jnp.kron(jnp.eye(E, dtype=jnp.float32), params["wo"])   # (ED, E)
    seg = jnp.kron(jnp.eye(E, dtype=jnp.float32),
                   jnp.ones((Dout, Dout), jnp.float32))              # (ED, ED)

    slab = jnp.zeros((cfg["slab_rows"], cfg["pack_w"]), jnp.float32)
    slab = slab.at[cfg["R_BG2"], :E].set(params["bg2"][0])
    slab = slab.at[cfg["R_BO"], 0].set(params["bo"][0, 0])
    for l, b in enumerate(fused_bs):
        slab = slab.at[cfg["R_BIAS"] + l, :b.shape[1]].set(b[0])
    slab = slab.at[cfg["R_WG2"]:cfg["R_WG2"] + gh, :E].set(params["wg2"])
    slab = slab.at[cfg["R_SELWO"]:cfg["R_SELWO"] + ED, :E].set(sel_wo)
    slab = slab.at[cfg["R_SEG"]:cfg["R_SEG"] + ED, :ED].set(seg)
    return fused_ws, slab


# ----------------------------------------------------------------------------
# Forward wrapper
# ----------------------------------------------------------------------------
def _choose_batch_tile(B, max_tile=1024):
    # >=2 grid steps whenever B allows (v7x has 2 TensorCores), tiles a multiple
    # of 16 (bf16 sublane packing), capped so double-buffered blocks stay far
    # below every generation's VMEM while amortizing ~0.35us/step grid overhead.
    tb = _round_up(max((B + 1) // 2, 16), 16)
    return min(tb, max_tile)


def moe_forward(x, fused_ws, slab, cfg, batch_tile=None):
    B = x.shape[0]
    Din, E, Dout, ED = cfg["Din"], cfg["E"], cfg["Dout"], cfg["ED"]
    OUT_W = cfg["out_w"]

    TB = _choose_batch_tile(B) if batch_tile is None else _round_up(batch_tile, 16)
    n_steps = (B + TB - 1) // TB
    Bpad = n_steps * TB

    xb = x.astype(jnp.bfloat16)                  # bf16 input: half the DMA bytes
    if Bpad != B:
        xb = jnp.pad(xb, ((0, Bpad - B), (0, 0)))

    in_specs = [pl.BlockSpec((TB, Din), lambda i: (i, 0))]
    for w in fused_ws:
        in_specs.append(pl.BlockSpec(w.shape, lambda i: (0, 0)))
    in_specs.append(pl.BlockSpec(slab.shape, lambda i: (0, 0)))

    out = pl.pallas_call(
        make_moe_kernel(cfg),
        out_shape=jax.ShapeDtypeStruct((Bpad, OUT_W), jnp.float32),
        grid=(n_steps,),
        in_specs=in_specs,
        out_specs=pl.BlockSpec((TB, OUT_W), lambda i: (i, 0)),
        compiler_params=pltpu.CompilerParams(
            dimension_semantics=("parallel",),       # shards across v7x's 2 TCs
            vmem_limit_bytes=32 * 1024 * 1024),      # safe on v5e/v6e/v7x
    )(xb, *fused_ws, slab)

    out = out[:B]                                    # drop padded rows
    expert_outputs = out[:, :ED].reshape(B, E, Dout)
    gate_weights = out[:, ED:ED + E]
    final_output = out[:, ED + E:ED + E + 1]
    cosine_loss = jnp.mean(out[:, ED + E + 1])       # mean of per-row losses
    lambda_loss = calculate_lambda_max_loss(expert_outputs)
    return final_output, cosine_loss, lambda_loss, expert_outputs, gate_weights


# ----------------------------------------------------------------------------
# Main
# ----------------------------------------------------------------------------
if __name__ == "__main__":
    input_dim = 32
    hidden_dims = [32]
    output_dim = 16
    num_experts = 4
    gating_hidden_dim = 16
    batch = 8

    cfg = make_config(input_dim, hidden_dims, output_dim, num_experts,
                      gating_hidden_dim)

    key = jax.random.PRNGKey(0)
    kx, kp = jax.random.split(key)
    x = jax.random.normal(kx, (batch, input_dim), jnp.float32)
    params = init_params(kp, input_dim, hidden_dims, output_dim,
                         num_experts, gating_hidden_dim)
    fused_ws, slab = pack_params(params, cfg)

    (final_output, cosine_loss, lambda_loss,
     expert_outputs, gate_weights) = moe_forward(x, fused_ws, slab, cfg)
    jax.block_until_ready((final_output, cosine_loss, lambda_loss,
                           expert_outputs, gate_weights))

    assert final_output.shape == (batch, 1)
    assert expert_outputs.shape == (batch, num_experts, output_dim)
    assert gate_weights.shape == (batch, num_experts)
    assert bool(jnp.isfinite(cosine_loss)) and bool(jnp.isfinite(lambda_loss))
    print("KERNEL_OK")
</pallas_src>

<mosaic_0001>
module attributes {stable_mosaic.version = 11 : i64} {
  func.func @kernel(%arg0: i32, %arg1: memref<16x32xbf16, #tpu.memory_space<vmem>>, %arg2: memref<32x144xbf16, #tpu.memory_space<vmem>>, %arg3: memref<128x64xbf16, #tpu.memory_space<vmem>>, %arg4: memref<152x256xf32, #tpu.memory_space<vmem>>, %arg5: memref<16x128xf32, #tpu.memory_space<vmem>>) attributes {dimension_semantics = [#tpu.dimension_semantics<parallel>], iteration_bounds = array<i64: 1>, scalar_prefetch = 0 : i64, scratch_operands = 0 : i64, tpu.core_type = #tpu.core_type<tc>, window_params = [{transform_indices = @transform_0, window_bounds = array<i64: 16, 32>}, {pipeline_mode = #tpu.pipeline_mode<synchronous>, transform_indices = @transform_1, window_bounds = array<i64: 32, 144>}, {pipeline_mode = #tpu.pipeline_mode<synchronous>, transform_indices = @transform_2, window_bounds = array<i64: 128, 64>}, {pipeline_mode = #tpu.pipeline_mode<synchronous>, transform_indices = @transform_3, window_bounds = array<i64: 152, 256>}, {transform_indices = @transform_4, window_bounds = array<i64: 16, 128>}]} {
    %c0 = arith.constant 0 : index
    %c0_0 = arith.constant 0 : index
    %0 = vector.load %arg1[%c0, %c0_0] : memref<16x32xbf16, #tpu.memory_space<vmem>>, vector<16x32xbf16>
    %c2 = arith.constant 2 : index
    %c0_1 = arith.constant 0 : index
    %1 = vector.load %arg4[%c2, %c0_1] : memref<152x256xf32, #tpu.memory_space<vmem>>, vector<1x144xf32>
    %c0_2 = arith.constant 0 : index
    %c0_3 = arith.constant 0 : index
    %2 = vector.load %arg2[%c0_2, %c0_3] : memref<32x144xbf16, #tpu.memory_space<vmem>>, vector<32x144xbf16>
    %cst = arith.constant dense<0.000000e+00> : vector<16x144xf32>
    %3 = tpu.matmul %0, %2, %cst {dimension_numbers = #tpu.dot_dimension_numbers<[1], [0], [0], [1], [0, 0, 1, 1], [], []>} : vector<16x32xbf16>, vector<32x144xbf16>, vector<16x144xf32> -> vector<16x144xf32>
    %4 = vector.broadcast %1 : vector<1x144xf32> to vector<16x144xf32>
    %5 = arith.addf %3, %4 : vector<16x144xf32>
    %6 = vector.extract_strided_slice %5 {offsets = [0, 128], sizes = [16, 16], strides = [1, 1]} : vector<16x144xf32> to vector<16x16xf32>
    %cst_4 = arith.constant 0.000000e+00 : f32
    %7 = vector.broadcast %cst_4 : f32 to vector<16x16xf32>
    %8 = arith.maximumf %6, %7 : vector<16x16xf32>
    %9 = vector.extract_strided_slice %5 {offsets = [0, 0], sizes = [16, 128], strides = [1, 1]} : vector<16x144xf32> to vector<16x128xf32>
    %cst_5 = arith.constant 0.000000e+00 : f32
    %10 = vector.broadcast %cst_5 : f32 to vector<16x128xf32>
    %11 = arith.maximumf %9, %10 : vector<16x128xf32>
    %12 = arith.truncf %11 : vector<16x128xf32> to vector<16x128xbf16>
    %c3 = arith.constant 3 : index
    %c0_6 = arith.constant 0 : index
    %13 = vector.load %arg4[%c3, %c0_6] : memref<152x256xf32, #tpu.memory_space<vmem>>, vector<1x64xf32>
    %c0_7 = arith.constant 0 : index
    %c0_8 = arith.constant 0 : index
    %14 = vector.load %arg3[%c0_7, %c0_8] : memref<128x64xbf16, #tpu.memory_space<vmem>>, vector<128x64xbf16>
    %cst_9 = arith.constant dense<0.000000e+00> : vector<16x64xf32>
    %15 = tpu.matmul %12, %14, %cst_9 {dimension_numbers = #tpu.dot_dimension_numbers<[1], [0], [0], [1], [0, 0, 1, 1], [], []>} : vector<16x128xbf16>, vector<128x64xbf16>, vector<16x64xf32> -> vector<16x64xf32>
    %16 = vector.broadcast %13 : vector<1x64xf32> to vector<16x64xf32>
    %17 = arith.addf %15, %16 : vector<16x64xf32>
    %c8 = arith.constant 8 : index
    %c0_10 = arith.constant 0 : index
    %18 = vector.load %arg4[%c8, %c0_10] : memref<152x256xf32, #tpu.memory_space<vmem>>, vector<16x4xf32>
    %c0_11 = arith.constant 0 : index
    %c0_12 = arith.constant 0 : index
    %19 = vector.load %arg4[%c0_11, %c0_12] : memref<152x256xf32, #tpu.memory_space<vmem>>, vector<1x4xf32>
    %cst_13 = arith.constant dense<0.000000e+00> : vector<16x4xf32>
    %20 = tpu.matmul %8, %18, %cst_13 {dimension_numbers = #tpu.dot_dimension_numbers<[1], [0], [0], [1], [0, 0, 1, 1], [], []>} : vector<16x16xf32>, vector<16x4xf32>, vector<16x4xf32> -> vector<16x4xf32>
    %21 = vector.broadcast %19 : vector<1x4xf32> to vector<16x4xf32>
    %22 = arith.addf %20, %21 : vector<16x4xf32>
    %cst_14 = arith.constant dense<0xFF800000> : vector<16xf32>
    %23 = vector.multi_reduction <maximumf>, %22, %cst_14 [1] : vector<16x4xf32> to vector<16xf32>
    %24 = vector.shape_cast %23 : vector<16xf32> to vector<16x1xf32>
    %25 = vector.broadcast %24 : vector<16x1xf32> to vector<16x4xf32>
    %26 = arith.subf %22, %25 : vector<16x4xf32>
    %27 = math.exp %26 : vector<16x4xf32>
    %cst_15 = arith.constant dense<0.000000e+00> : vector<16xf32>
    %28 = vector.multi_reduction <add>, %27, %cst_15 [1] : vector<16x4xf32> to vector<16xf32>
    %29 = vector.shape_cast %28 : vector<16xf32> to vector<16x1xf32>
    %30 = vector.broadcast %29 : vector<16x1xf32> to vector<16x4xf32>
    %31 = arith.divf %27, %30 : vector<16x4xf32>
    %c88 = arith.constant 88 : index
    %c0_16 = arith.constant 0 : index
    %32 = vector.load %arg4[%c88, %c0_16] : memref<152x256xf32, #tpu.memory_space<vmem>>, vector<64x64xf32>
    %33 = arith.mulf %17, %17 : vector<16x64xf32>
    %cst_17 = arith.constant dense<0.000000e+00> : vector<16x64xf32>
    %34 = tpu.matmul %33, %32, %cst_17 {dimension_numbers = #tpu.dot_dimension_numbers<[1], [0], [0], [1], [0, 0, 1, 1], [], []>} : vector<16x64xf32>, vector<64x64xf32>, vector<16x64xf32> -> vector<16x64xf32>
    %cst_18 = arith.constant 9.99999996E-13 : f32
    %35 = vector.broadcast %cst_18 : f32 to vector<16x64xf32>
    %36 = arith.maximumf %34, %35 : vector<16x64xf32>
    %37 = math.rsqrt %36 : vector<16x64xf32>
    %38 = arith.mulf %17, %37 : vector<16x64xf32>
    %cst_19 = arith.constant 0.000000e+00 : f32
    %39 = vector.broadcast %cst_19 : f32 to vector<16x64xf32>
    %c16_i32 = arith.constant 16 : i32
    %40 = tpu.dynamic_rotate %38 by %c16_i32 dim 1 : vector<16x64xf32>, i32 -> vector<16x64xf32>
    %41 = arith.mulf %38, %40 : vector<16x64xf32>
    %cst_20 = arith.constant dense<0.000000e+00> : vector<16x64xf32>
    %42 = tpu.matmul %41, %32, %cst_20 {dimension_numbers = #tpu.dot_dimension_numbers<[1], [0], [0], [1], [0, 0, 1, 1], [], []>} : vector<16x64xf32>, vector<64x64xf32>, vector<16x64xf32> -> vector<16x64xf32>
    %43 = math.absf %42 : vector<16x64xf32>
    %44 = arith.addf %39, %43 : vector<16x64xf32>
    %c32_i32 = arith.constant 32 : i32
    %45 = tpu.dynamic_rotate %38 by %c32_i32 dim 1 : vector<16x64xf32>, i32 -> vector<16x64xf32>
    %46 = arith.mulf %38, %45 : vector<16x64xf32>
    %cst_21 = arith.constant dense<0.000000e+00> : vector<16x64xf32>
    %47 = tpu.matmul %46, %32, %cst_21 {dimension_numbers = #tpu.dot_dimension_numbers<[1], [0], [0], [1], [0, 0, 1, 1], [], []>} : vector<16x64xf32>, vector<64x64xf32>, vector<16x64xf32> -> vector<16x64xf32>
    %48 = math.absf %47 : vector<16x64xf32>
    %49 = arith.addf %44, %48 : vector<16x64xf32>
    %c48_i32 = arith.constant 48 : i32
    %50 = tpu.dynamic_rotate %38 by %c48_i32 dim 1 : vector<16x64xf32>, i32 -> vector<16x64xf32>
    %51 = arith.mulf %38, %50 : vector<16x64xf32>
    %cst_22 = arith.constant dense<0.000000e+00> : vector<16x64xf32>
    %52 = tpu.matmul %51, %32, %cst_22 {dimension_numbers = #tpu.dot_dimension_numbers<[1], [0], [0], [1], [0, 0, 1, 1], [], []>} : vector<16x64xf32>, vector<64x64xf32>, vector<16x64xf32> -> vector<16x64xf32>
    %53 = math.absf %52 : vector<16x64xf32>
    %54 = arith.addf %49, %53 : vector<16x64xf32>
    %cst_23 = arith.constant dense<0.000000e+00> : vector<16xf32>
    %55 = vector.multi_reduction <add>, %54, %cst_23 [1] : vector<16x64xf32> to vector<16xf32>
    %56 = vector.shape_cast %55 : vector<16xf32> to vector<16x1xf32>
    %cst_24 = arith.constant 0.00520833349 : f32
    %57 = vector.broadcast %cst_24 : f32 to vector<16x1xf32>
    %58 = arith.mulf %56, %57 : vector<16x1xf32>
    %c24 = arith.constant 24 : index
    %c0_25 = arith.constant 0 : index
    %59 = vector.load %arg4[%c24, %c0_25] : memref<152x256xf32, #tpu.memory_space<vmem>>, vector<64x4xf32>
    %cst_26 = arith.constant dense<0.000000e+00> : vector<16x4xf32>
    %60 = tpu.matmul %38, %59, %cst_26 {dimension_numbers = #tpu.dot_dimension_numbers<[1], [0], [0], [1], [0, 0, 1, 1], [], []>} : vector<16x64xf32>, vector<64x4xf32>, vector<16x4xf32> -> vector<16x4xf32>
    %c1 = arith.constant 1 : index
    %c0_27 = arith.constant 0 : index
    %61 = vector.load %arg4[%c1, %c0_27] : memref<152x256xf32, #tpu.memory_space<vmem>>, vector<1x1xf32>
    %62 = arith.mulf %31, %60 : vector<16x4xf32>
    %cst_28 = arith.constant dense<0.000000e+00> : vector<16xf32>
    %63 = vector.multi_reduction <add>, %62, %cst_28 [1] : vector<16x4xf32> to vector<16xf32>
    %64 = vector.shape_cast %63 : vector<16xf32> to vector<16x1xf32>
    %65 = vector.broadcast %61 : vector<1x1xf32> to vector<16x1xf32>
    %66 = arith.addf %64, %65 : vector<16x1xf32>
    %cst_29 = arith.constant 0.000000e+00 : f32
    %67 = vector.broadcast %cst_29 : f32 to vector<16x58xf32>
    %68 = tpu.concatenate %38, %31, %66, %58, %67 in 1 : vector<16x64xf32>, vector<16x4xf32>, vector<16x1xf32>, vector<16x1xf32>, vector<16x58xf32> -> vector<16x128xf32>
    %c0_30 = arith.constant 0 : index
    %c0_31 = arith.constant 0 : index
    %69 = vector.load %arg5[%c0_30, %c0_31] : memref<16x128xf32, #tpu.memory_space<vmem>>, vector<16x128xf32>
    tpu.vector_store %arg5[%c0_30, %c0_31], %68 {strides = array<i32>} : memref<16x128xf32, #tpu.memory_space<vmem>>, vector<16x128xf32>,
    return
  }
  func.func @transform_0(%arg0: i32) -> (i32, i32) {
    %c0_i32 = arith.constant 0 : i32
    %c0_i32_0 = arith.constant 0 : i32
    return %arg0, %c0_i32 : i32, i32
  }
  func.func @transform_1(%arg0: i32) -> (i32, i32) {
    %c0_i32 = arith.constant 0 : i32
    %c0_i32_0 = arith.constant 0 : i32
    %c0_i32_1 = arith.constant 0 : i32
    return %c0_i32, %c0_i32_0 : i32, i32
  }
  func.func @transform_2(%arg0: i32) -> (i32, i32) {
    %c0_i32 = arith.constant 0 : i32
    %c0_i32_0 = arith.constant 0 : i32
    %c0_i32_1 = arith.constant 0 : i32
    return %c0_i32, %c0_i32_0 : i32, i32
  }
  func.func @transform_3(%arg0: i32) -> (i32, i32) {
    %c0_i32 = arith.constant 0 : i32
    %c0_i32_0 = arith.constant 0 : i32
    %c0_i32_1 = arith.constant 0 : i32
    return %c0_i32, %c0_i32_0 : i32, i32
  }
  func.func @transform_4(%arg0: i32) -> (i32, i32) {
    %c0_i32 = arith.constant 0 : i32
    %c0_i32_0 = arith.constant 0 : i32
    return %arg0, %c0_i32 : i32, i32
  }
}

</mosaic_0001>

<llo_original>
// kernel: tpu_custom_call.1
$region0: #{tpu_custom_call.1}
  #allocation0 [shape = 'u32[]', space=smem, size = 0x4, offset = 0x4, fixed_abs, tag = 'smem constant byte address 0x4 - core index']
  #allocation1 [shape = 'u32[72,128]{1,0:T(1,128)}', space=vmem, size = 0x9000, scoped, tag = 'internal scratch']
  %s0 = inlined_call_operand.vmem [shape: bf16[16,32], index: 0, kind: input, shape index: {}]
  %s1 = inlined_call_operand.vmem [shape: bf16[32,144], index: 1, kind: input, shape index: {}]
  %s2 = inlined_call_operand.vmem [shape: bf16[128,64], index: 2, kind: input, shape index: {}]
  %s3 = inlined_call_operand.hbm [shape: f32[152,256], index: 3, kind: input, shape index: {}]
  %s4 = inlined_call_operand.hbm [shape: f32[16,128], index: 4, kind: output, shape index: {}]
  %s5 = sld [smem:[#allocation0]]
  $region30: #{tpu_custom_call.1} parent=0
    _
  %s7 = ssub.s32 1, %s5
  %s8 = scalar_select 0, %s7, %s5
  $region1: #{tpu_custom_call.1} parent=0
    #allocation2 [shape = 'u8[155648]{0}', space=vmem, size = 0x26000, scoped, tag = 'input window, operand 3, single buffered']
    #allocation3 [shape = 's32[1]{0}', space=sflag, size = 0x4, scoped, tag = 'scoped memory for tpu_custom_call.1']
    #allocation4 [shape = 's32[1]{0}', space=sflag, size = 0x4, scoped, tag = 'scoped memory for tpu_custom_call.1']
    #allocation5 [shape = 'u8[8192]{0}', space=vmem, size = 0x2000, scoped, tag = 'output window, operand 0, single buffered']
    %9 = vsyncpa [#allocation3], 0
    %10 = vsyncpa [#allocation4], 0
    // Predicated region
    $region2: #{tpu_custom_call.1} parent=1 // pred_check
      _
    $region3: #{tpu_custom_call.1} parent=1 // pred_check_branch
      %12 = sbr.rel (0) target = $region5
    $region4: #{tpu_custom_call.1} parent=1 // pred_region
      _
    $region5: #{tpu_custom_call.1} parent=1 // pred_fallthru
      _
    // Predicated region
    $region6: #{tpu_custom_call.1} parent=1 // pred_check
      _
    $region7: #{tpu_custom_call.1} parent=1 // pred_check_branch
      %14 = sbr.rel (0) target = $region9
    $region8: #{tpu_custom_call.1} parent=1 // pred_region
      _
    $region9: #{tpu_custom_call.1} parent=1 // pred_fallthru
      _
    // Predicated region
    $region10: #{tpu_custom_call.1} parent=1 // pred_check
      _
    $region11: #{tpu_custom_call.1} parent=1 // pred_check_branch
      %16 = sbr.rel (0) target = $region13
    $region12: #{tpu_custom_call.1} parent=1 // pred_region
      _
    $region13: #{tpu_custom_call.1} parent=1 // pred_fallthru
      _
    // Predicated region
    $region14: #{tpu_custom_call.1} parent=1 // pred_check
      _
    $region15: #{tpu_custom_call.1} parent=1 // pred_check_branch
      %18 = sbr.rel (0) target = $region17
    $region16: #{tpu_custom_call.1} parent=1 // pred_region
      %20 = vsyncadd [#allocation3], 0
      %s21 = sshll.u32 %s3, 4
      %s22 = int_to_ptr.hbm [resolvable:$true] %s21
      %s23 = sshll.u32 [#allocation2], 4
      %s24 = int_to_ptr.vmem [resolvable:$true] %s23
      %29 = dma.hbm_to_vmem [thread:$0]  %s22, 4864, %s24, [#allocation3], 256, 256, 16
    $region17: #{tpu_custom_call.1} parent=1 // pred_fallthru
      _
    // Predicated region
    $region18: #{tpu_custom_call.1} parent=1 // pred_check
      _
    $region19: #{tpu_custom_call.1} parent=1 // pred_check_branch
      %31 = sbr.rel (0) target = $region21
    $region20: #{tpu_custom_call.1} parent=1 // pred_region
      %33 = dma.done [#allocation3], 4864
    $region21: #{tpu_custom_call.1} parent=1 // pred_fallthru
      _
    %v35 = vld [vmem:[%s0] sm:$0xf]
    %v36 = vld [vmem:[%s0 + $0x4] sm:$0xf]
    %s37 = scalar_lea.vmem [#allocation2], 2
    %v38 = vld [vmem:[%s37] ss:$8 sm:$0x3]
    %v39 = vld [vmem:[%s1] sm:$0xff]
    %v40 = vld [vmem:[%s1 + $0x8] sm:$0xff]
    %v41 = vld [vmem:[%s1 + $0x10] sm:$0xff]
    %v42 = vld [vmem:[%s1 + $0x18] sm:$0xff]
    %v44 = vperm.slane %v38, 0
    %v45 = vperm.slane %v38, 1
    %v50 = vunpack.c.l.b16 %v35
    %v51 = vunpack.c.l.b16 %v36
    %v52 = vpack.c.b16 %v51, %v50
    %v57 = vunpack.c.l.b16 %v39
    %v58 = vunpack.c.h.b16 %v39
    %v59 = vunpack.c.l.b16 %v40
    %v60 = vunpack.c.h.b16 %v40
    %v61 = vunpack.c.l.b16 %v41
    %v62 = vunpack.c.h.b16 %v41
    %v63 = vunpack.c.l.b16 %v42
    %v64 = vunpack.c.h.b16 %v42
    %v65 = vpack.c.b16 %v59, %v57
    %v66 = vpack.c.b16 %v60, %v58
    %v67 = vpack.c.b16 %v63, %v61
    %v68 = vpack.c.b16 %v64, %v62
    %vm73 = vcmask 261120
    %v75 = vsel %vm73, %v52, 0
    %77 = vmatpush.bf16.msra.mxu0 0
    %78 = vmatpush.bf16.msra.mxu0 0
    %79 = vmatpush.bf16.msra.mxu0 0
    %80 = vmatpush.bf16.msra.mxu0 0
    %81 = vmatpush.bf16.msra.mxu0 0
    %82 = vmatpush.bf16.msra.mxu0 0
    %83 = vmatpush.bf16.msra.mxu0 %v67
    %84 = vmatpush.bf16.msra.mxu0 %v65
    %85 = vmatmul.bf16.gmra.mxu0 %v75
    %v86 = vpop.f32.mrf.mxu0
    %v87 = vadd.f32 %v44, %v86
    %v88 = vpop.f32.mrf.mxu0
    %v89 = vadd.f32 %v44, %v88
    %90 = vdwg.mxu0
    %91 = vmatpush.bf16.msra.mxu0 0
    %92 = vmatpush.bf16.msra.mxu0 0
    %93 = vmatpush.bf16.msra.mxu0 0
    %94 = vmatpush.bf16.msra.mxu0 0
    %95 = vmatpush.bf16.msra.mxu0 0
    %96 = vmatpush.bf16.msra.mxu0 0
    %97 = vmatpush.bf16.msra.mxu0 %v68
    %98 = vmatpush.bf16.msra.mxu0 %v66
    %99 = vmatmul.bf16.gmra.mxu0 %v75
    %v100 = vpop.f32.mrf.mxu0
    %v101 = vadd.f32 %v45, %v100
    %v102 = vpop.f32.mrf.mxu0
    %v103 = vadd.f32 %v45, %v102
    %104 = vdwg.mxu0
    %v105 = vmax.f32 %v101, 0.0
    %v106 = vmax.f32 %v103, 0.0
    %v107 = vmax.f32 %v87, 0.0
    %v108 = vmax.f32 %v89, 0.0
    %v109 = vpack.c.bf16 %v108, %v107
    %v110 = vld [vmem:[#allocation2 + $0x3] ss:$0 sm:$0xff]
    %v111 = vld [vmem:[%s2] sm:$0xf]
    %v112 = vld [vmem:[%s2 + $0x4] sm:$0xf]
    %v113 = vld [vmem:[%s2 + $0x8] sm:$0xf]
    %v114 = vld [vmem:[%s2 + $0xc] sm:$0xf]
    %v115 = vld [vmem:[%s2 + $0x10] sm:$0xf]
    %v116 = vld [vmem:[%s2 + $0x14] sm:$0xf]
    %v117 = vld [vmem:[%s2 + $0x18] sm:$0xf]
    %v118 = vld [vmem:[%s2 + $0x1c] sm:$0xf]
    %v119 = vld [vmem:[%s2 + $0x20] sm:$0xf]
    %v120 = vld [vmem:[%s2 + $0x24] sm:$0xf]
    %v121 = vld [vmem:[%s2 + $0x28] sm:$0xf]
    %v122 = vld [vmem:[%s2 + $0x2c] sm:$0xf]
    %v123 = vld [vmem:[%s2 + $0x30] sm:$0xf]
    %v124 = vld [vmem:[%s2 + $0x34] sm:$0xf]
    %v125 = vld [vmem:[%s2 + $0x38] sm:$0xf]
    %v126 = vld [vmem:[%s2 + $0x3c] sm:$0xf]
    %v143 = vunpack.c.l.b16 %v111
    %v144 = vunpack.c.l.b16 %v112
    %v145 = vunpack.c.l.b16 %v113
    %v146 = vunpack.c.l.b16 %v114
    %v147 = vunpack.c.l.b16 %v115
    %v148 = vunpack.c.l.b16 %v116
    %v149 = vunpack.c.l.b16 %v117
    %v150 = vunpack.c.l.b16 %v118
    %v151 = vunpack.c.l.b16 %v119
    %v152 = vunpack.c.l.b16 %v120
    %v153 = vunpack.c.l.b16 %v121
    %v154 = vunpack.c.l.b16 %v122
    %v155 = vunpack.c.l.b16 %v123
    %v156 = vunpack.c.l.b16 %v124
    %v157 = vunpack.c.l.b16 %v125
    %v158 = vunpack.c.l.b16 %v126
    %v159 = vpack.c.b16 %v144, %v143
    %v160 = vpack.c.b16 %v146, %v145
    %v161 = vpack.c.b16 %v148, %v147
    %v162 = vpack.c.b16 %v150, %v149
    %v163 = vpack.c.b16 %v152, %v151
    %v164 = vpack.c.b16 %v154, %v153
    %v165 = vpack.c.b16 %v156, %v155
    %v166 = vpack.c.b16 %v158, %v157
    %175 = vmatpush.bf16.msra.mxu0 %v166
    %176 = vmatpush.bf16.msra.mxu0 %v165
    %177 = vmatpush.bf16.msra.mxu0 %v164
    %178 = vmatpush.bf16.msra.mxu0 %v163
    %179 = vmatpush.bf16.msra.mxu0 %v162
    %180 = vmatpush.bf16.msra.mxu0 %v161
    %181 = vmatpush.bf16.msra.mxu0 %v160
    %182 = vmatpush.bf16.msra.mxu0 %v159
    %183 = vmatmul.bf16.gmra.mxu0 %v109
    %v184 = vpop.f32.mrf.mxu0
    %v185 = vadd.f32 %v110, %v184
    %v186 = vpop.f32.mrf.mxu0
    %v187 = vadd.f32 %v110, %v186
    %188 = vdwg.mxu0
    %v189 = vld [vmem:[#allocation2 + $0x10] sm:$0xff]
    %v190 = vld [vmem:[#allocation2 + $0x20] sm:$0xff]
    %v191 = vld [vmem:[#allocation2] ss:$0 sm:$0xff]
    %vm192 = vcmask 130048
    %v194 = vsel %vm192, %v105, 0
    %v197 = vsel %vm192, %v106, 0
    %199 = vmatpush.msra.mxu0 0.0
    %200 = vmatpush.msra.mxu0 0.0
    %201 = vmatpush.msra.mxu0 0.0
    %202 = vmatpush.msra.mxu0 0.0
    %203 = vmatpush.msra.mxu0 0.0
    %204 = vmatpush.msra.mxu0 0.0
    %205 = vmatpush.msra.mxu0 0.0
    %206 = vmatpush.msra.mxu0 0.0
    %207 = vmatpush.msra.mxu0 0.0
    %208 = vmatpush.msra.mxu0 0.0
    %209 = vmatpush.msra.mxu0 0.0
    %210 = vmatpush.msra.mxu0 0.0
    %211 = vmatpush.msra.mxu0 0.0
    %212 = vmatpush.msra.mxu0 0.0
    %213 = vmatpush.msra.mxu0 %v190
    %214 = vmatpush.msra.mxu0 %v189
    %215 = vmatmul.f32.gmra.mxu0 %v194
    %v216 = vpop.f32.mrf.mxu0
    %v217 = vadd.f32 %v191, %v216
    %218 = vmatmul.f32.gmra.mxu0 %v197
    %v219 = vpop.f32.mrf.mxu0
    %v220 = vadd.f32 %v191, %v219
    %221 = vdwg.mxu0
    %vm222 = vcmask 31744
    %v223 = vsel %vm222, %v217, -inf
    %224 = vmax.xlane.f32.xlu0 %v223
    %v225 = vpop.xlane.xlu0 %224
    %v226 = vsel %vm222, %v220, -inf
    %227 = vmax.xlane.f32.xlu0 %v226
    %v228 = vpop.xlane.xlu0 %227
    %v229 = vsub.f32 %v217, %v225
    %v230 = vsub.f32 %v220, %v228
    %v231 = vmul.f32 %v229, 1.442695
    %v232 = vpow.pop %v231
    %v233 = vmul.f32 %v230, 1.442695
    %v234 = vpow.pop %v233
    %v235 = vsel %vm222, %v232, 0.0
    %236 = vadd.xlane.f32.xlu0 %v235
    %v237 = vpop.xlane.xlu0 %236
    %v238 = vsel %vm222, %v234, 0.0
    %239 = vadd.xlane.f32.xlu0 %v238
    %v240 = vpop.xlane.xlu0 %239
    %v241 = vrcp.pop %v237
    %v242 = vmul.f32 %v237, %v241
    %v243 = vsub.f32 1.0, %v242
    %v244 = vmul.f32 %v241, %v243
    %v245 = vadd.f32 %v241, %v244
    %vm246 = vweird.f32 %v237
    %vm247 = vweird.f32 %v241
    %vm248 = vmor %vm246, %vm247
    %v249 = vsel %vm248, %v241, %v245
    %v250 = vand.u32 2147483647, %v237
    %vm251 = vcmp.eq.f32.partialorder %v250, 8.507059e+37
    %v252 = vand.u32 %v237, 2147483648
    %v253 = vor.u32 1.1754944e-38, %v252
    %v254 = vsel %vm251, %v253, %v249
    %v255 = vmul.f32 %v232, %v254
    %v256 = vrcp.pop %v240
    %v257 = vmul.f32 %v240, %v256
    %v258 = vsub.f32 1.0, %v257
    %v259 = vmul.f32 %v256, %v258
    %v260 = vadd.f32 %v256, %v259
    %vm261 = vweird.f32 %v240
    %vm262 = vweird.f32 %v256
    %vm263 = vmor %vm261, %vm262
    %v264 = vsel %vm263, %v256, %v260
    %v265 = vand.u32 2147483647, %v240
    %vm266 = vcmp.eq.f32.partialorder %v265, 8.507059e+37
    %v267 = vand.u32 %v240, 2147483648
    %v268 = vor.u32 1.1754944e-38, %v267
    %v269 = vsel %vm266, %v268, %v264
    %v270 = vmul.f32 %v234, %v269
    %v271 = vld [vmem:[#allocation2 + $0xb0] sm:$0xff]
    %v272 = vld [vmem:[#allocation2 + $0xc0] sm:$0xff]
    %v273 = vld [vmem:[#allocation2 + $0xd0] sm:$0xff]
    %v274 = vld [vmem:[#allocation2 + $0xe0] sm:$0xff]
    %v275 = vld [vmem:[#allocation2 + $0xf0] sm:$0xff]
    %v276 = vld [vmem:[#allocation2 + $0x100] sm:$0xff]
    %v277 = vld [vmem:[#allocation2 + $0x110] sm:$0xff]
    %v278 = vld [vmem:[#allocation2 + $0x120] sm:$0xff]
    %v279 = vmul.f32 %v185, %v185
    %v280 = vmul.f32 %v187, %v187
    %vm281 = vcmask 523264
    %v283 = vsel %vm281, %v279, 0
    %v286 = vsel %vm281, %v280, 0
    %288 = vmatpush.msra.mxu0 0.0
    %289 = vmatpush.msra.mxu0 0.0
    %290 = vmatpush.msra.mxu0 0.0
    %291 = vmatpush.msra.mxu0 0.0
    %292 = vmatpush.msra.mxu0 0.0
    %293 = vmatpush.msra.mxu0 0.0
    %294 = vmatpush.msra.mxu0 0.0
    %295 = vmatpush.msra.mxu0 0.0
    %296 = vmatpush.msra.mxu0 %v278
    %297 = vmatpush.msra.mxu0 %v277
    %298 = vmatpush.msra.mxu0 %v276
    %299 = vmatpush.msra.mxu0 %v275
    %300 = vmatpush.msra.mxu0 %v274
    %301 = vmatpush.msra.mxu0 %v273
    %302 = vmatpush.msra.mxu0 %v272
    %303 = vmatpush.msra.mxu0 %v271
    %304 = vmatmul.f32.gmra.mxu0 %v283
    %v305 = vpop.f32.mrf.mxu0
    %v306 = vadd.f32 0.0, %v305
    %307 = vmatmul.f32.gmra.mxu0 %v286
    %v308 = vpop.f32.mrf.mxu0
    %v309 = vadd.f32 0.0, %v308
    %310 = vdwg.mxu0
    %v311 = vmax.f32 %v306, 1e-12
    %v312 = vmax.f32 %v309, 1e-12
    %v313 = vrsqrt.pop %v311
    %v314 = vmul.f32 %v313, %v311
    %v315 = vmul.f32 %v314, %v313
    %v316 = vmul.f32 0.5, %v315
    %v317 = vsub.f32 1.5, %v316
    %v318 = vmul.f32 %v313, %v317
    %vm319 = vweird.f32 %v311
    %vm320 = vweird.f32 %v313
    %vm321 = vmor %vm319, %vm320
    %v322 = vsel %vm321, %v313, %v318
    %v323 = vrsqrt.pop %v312
    %v324 = vmul.f32 %v323, %v312
    %v325 = vmul.f32 %v324, %v323
    %v326 = vmul.f32 0.5, %v325
    %v327 = vsub.f32 1.5, %v326
    %v328 = vmul.f32 %v323, %v327
    %vm329 = vweird.f32 %v312
    %vm330 = vweird.f32 %v323
    %vm331 = vmor %vm329, %vm330
    %v332 = vsel %vm331, %v323, %v328
    %v333 = vmul.f32 %v185, %v322
    %v334 = vmul.f32 %v187, %v332
    %vm335 = vcmask 1048064
    %336 = vrot.lane.b32.xlu0 %v333, 64
    %v337 = vpop.permute.xlu0 %336
    %v338 = vsel %vm335, %v337, %v333
    %339 = vrot.lane.b32.xlu0 %v334, 64
    %v340 = vpop.permute.xlu0 %339
    %v341 = vsel %vm335, %v340, %v334
    %342 = vrot.lane.b32.xlu0 %v338, 64
    %v343 = vpop.permute.xlu0 %342
    %344 = vrot.lane.b32.xlu0 %v341, 64
    %v345 = vpop.permute.xlu0 %344
    %v346 = vsel %vm335, %v343, %v333
    %v347 = vsel %vm335, %v345, %v334
    %350 = vrot.lane.b32.xlu0 %v346, 80
    %v351 = vpop.permute.xlu0 %350
    %352 = vrot.lane.b32.xlu0 %v347, 80
    %v353 = vpop.permute.xlu0 %352
    %v356 = vmul.f32 %v333, %v351
    %v357 = vmul.f32 %v334, %v353
    %v359 = vsel %vm281, %v356, 0
    %v362 = vsel %vm281, %v357, 0
    %364 = vmatpush.msra.mxu0 0.0
    %365 = vmatpush.msra.mxu0 0.0
    %366 = vmatpush.msra.mxu0 0.0
    %367 = vmatpush.msra.mxu0 0.0
    %368 = vmatpush.msra.mxu0 0.0
    %369 = vmatpush.msra.mxu0 0.0
    %370 = vmatpush.msra.mxu0 0.0
    %371 = vmatpush.msra.mxu0 0.0
    %372 = vmatpush.msra.mxu0 %v278
    %373 = vmatpush.msra.mxu0 %v277
    %374 = vmatpush.msra.mxu0 %v276
    %375 = vmatpush.msra.mxu0 %v275
    %376 = vmatpush.msra.mxu0 %v274
    %377 = vmatpush.msra.mxu0 %v273
    %378 = vmatpush.msra.mxu0 %v272
    %379 = vmatpush.msra.mxu0 %v271
    %380 = vmatmul.f32.gmra.mxu0 %v359
    %v381 = vpop.f32.mrf.mxu0
    %v382 = vadd.f32 0.0, %v381
    %383 = vmatmul.f32.gmra.mxu0 %v362
    %v384 = vpop.f32.mrf.mxu0
    %v385 = vadd.f32 0.0, %v384
    %386 = vdwg.mxu0
    %v387 = vand.u32 2147483647, %v382
    %v388 = vand.u32 2147483647, %v385
    %v389 = vadd.f32 %v387, 0.0
    %v390 = vadd.f32 %v388, 0.0
    %391 = vrot.lane.b32.xlu0 %v346, 96
    %v392 = vpop.permute.xlu0 %391
    %393 = vrot.lane.b32.xlu0 %v347, 96
    %v394 = vpop.permute.xlu0 %393
    %v397 = vmul.f32 %v333, %v392
    %v398 = vmul.f32 %v334, %v394
    %v400 = vsel %vm281, %v397, 0
    %v403 = vsel %vm281, %v398, 0
    %405 = vmatpush.msra.mxu0 0.0
    %406 = vmatpush.msra.mxu0 0.0
    %407 = vmatpush.msra.mxu0 0.0
    %408 = vmatpush.msra.mxu0 0.0
    %409 = vmatpush.msra.mxu0 0.0
    %410 = vmatpush.msra.mxu0 0.0
    %411 = vmatpush.msra.mxu0 0.0
    %412 = vmatpush.msra.mxu0 0.0
    %413 = vmatpush.msra.mxu0 %v278
    %414 = vmatpush.msra.mxu0 %v277
    %415 = vmatpush.msra.mxu0 %v276
    %416 = vmatpush.msra.mxu0 %v275
    %417 = vmatpush.msra.mxu0 %v274
    %418 = vmatpush.msra.mxu0 %v273
    %419 = vmatpush.msra.mxu0 %v272
    %420 = vmatpush.msra.mxu0 %v271
    %421 = vmatmul.f32.gmra.mxu0 %v400
    %v422 = vpop.f32.mrf.mxu0
    %v423 = vadd.f32 0.0, %v422
    %424 = vmatmul.f32.gmra.mxu0 %v403
    %v425 = vpop.f32.mrf.mxu0
    %v426 = vadd.f32 0.0, %v425
    %427 = vdwg.mxu0
    %v428 = vand.u32 2147483647, %v423
    %v429 = vand.u32 2147483647, %v426
    %v430 = vadd.f32 %v389, %v428
    %v431 = vadd.f32 %v390, %v429
    %432 = vrot.lane.b32.xlu0 %v346, 112
    %v433 = vpop.permute.xlu0 %432
    %434 = vrot.lane.b32.xlu0 %v347, 112
    %v435 = vpop.permute.xlu0 %434
    %v438 = vmul.f32 %v333, %v433
    %v439 = vmul.f32 %v334, %v435
    %v441 = vsel %vm281, %v438, 0
    %v444 = vsel %vm281, %v439, 0
    %446 = vmatpush.msra.mxu0 0.0
    %447 = vmatpush.msra.mxu0 0.0
    %448 = vmatpush.msra.mxu0 0.0
    %449 = vmatpush.msra.mxu0 0.0
    %450 = vmatpush.msra.mxu0 0.0
    %451 = vmatpush.msra.mxu0 0.0
    %452 = vmatpush.msra.mxu0 0.0
    %453 = vmatpush.msra.mxu0 0.0
    %454 = vmatpush.msra.mxu0 %v278
    %455 = vmatpush.msra.mxu0 %v277
    %456 = vmatpush.msra.mxu0 %v276
    %457 = vmatpush.msra.mxu0 %v275
    %458 = vmatpush.msra.mxu0 %v274
    %459 = vmatpush.msra.mxu0 %v273
    %460 = vmatpush.msra.mxu0 %v272
    %461 = vmatpush.msra.mxu0 %v271
    %462 = vmatmul.f32.gmra.mxu0 %v441
    %v463 = vpop.f32.mrf.mxu0
    %v464 = vadd.f32 0.0, %v463
    %465 = vmatmul.f32.gmra.mxu0 %v444
    %v466 = vpop.f32.mrf.mxu0
    %v467 = vadd.f32 0.0, %v466
    %468 = vdwg.mxu0
    %v469 = vand.u32 2147483647, %v464
    %v470 = vand.u32 2147483647, %v467
    %v471 = vadd.f32 %v430, %v469
    %v472 = vadd.f32 %v431, %v470
    %v473 = vsel %vm281, %v471, 0.0
    %474 = vadd.xlane.f32.xlu0 %v473
    %v475 = vpop.xlane.xlu0 %474
    %v476 = vsel %vm281, %v472, 0.0
    %477 = vadd.xlane.f32.xlu0 %v476
    %v478 = vpop.xlane.xlu0 %477
    %v479 = vmul.f32 %v475, 0.0052083335
    %v480 = vmul.f32 %v478, 0.0052083335
    %v481 = vld [vmem:[#allocation2 + $0x30] sm:$0xff]
    %v482 = vld [vmem:[#allocation2 + $0x40] sm:$0xff]
    %v483 = vld [vmem:[#allocation2 + $0x50] sm:$0xff]
    %v484 = vld [vmem:[#allocation2 + $0x60] sm:$0xff]
    %v485 = vld [vmem:[#allocation2 + $0x70] sm:$0xff]
    %v486 = vld [vmem:[#allocation2 + $0x80] sm:$0xff]
    %v487 = vld [vmem:[#allocation2 + $0x90] sm:$0xff]
    %v488 = vld [vmem:[#allocation2 + $0xa0] sm:$0xff]
    %v490 = vsel %vm281, %v333, 0
    %v493 = vsel %vm281, %v334, 0
    %495 = vmatpush.msra.mxu0 0.0
    %496 = vmatpush.msra.mxu0 0.0
    %497 = vmatpush.msra.mxu0 0.0
    %498 = vmatpush.msra.mxu0 0.0
    %499 = vmatpush.msra.mxu0 0.0
    %500 = vmatpush.msra.mxu0 0.0
    %501 = vmatpush.msra.mxu0 0.0
    %502 = vmatpush.msra.mxu0 0.0
    %503 = vmatpush.msra.mxu0 %v488
    %504 = vmatpush.msra.mxu0 %v487
    %505 = vmatpush.msra.mxu0 %v486
    %506 = vmatpush.msra.mxu0 %v485
    %507 = vmatpush.msra.mxu0 %v484
    %508 = vmatpush.msra.mxu0 %v483
    %509 = vmatpush.msra.mxu0 %v482
    %510 = vmatpush.msra.mxu0 %v481
    %511 = vmatmul.f32.gmra.mxu0 %v490
    %v512 = vpop.f32.mrf.mxu0
    %v513 = vadd.f32 0.0, %v512
    %514 = vmatmul.f32.gmra.mxu0 %v493
    %v515 = vpop.f32.mrf.mxu0
    %v516 = vadd.f32 0.0, %v515
    %517 = vdwg.mxu0
    %v518 = vld [vmem:[#allocation2 + $0x1] ss:$0 sm:$0xff]
    %v519 = vmul.f32 %v255, %v513
    %v520 = vmul.f32 %v270, %v516
    %v521 = vsel %vm222, %v519, 0.0
    %522 = vadd.xlane.f32.xlu0 %v521
    %v523 = vpop.xlane.xlu0 %522
    %v524 = vsel %vm222, %v520, 0.0
    %525 = vadd.xlane.f32.xlu0 %v524
    %v526 = vpop.xlane.xlu0 %525
    %v527 = vadd.f32 %v523, %v518
    %v528 = vadd.f32 %v526, %v518
    %531 = vrot.lane.b32.xlu0 %v255, 64
    %v532 = vpop.permute.xlu0 %531
    %533 = vrot.lane.b32.xlu0 %v270, 64
    %v534 = vpop.permute.xlu0 %533
    %539 = vrot.lane.b32.xlu0 %v527, 68
    %v540 = vpop.permute.xlu0 %539
    %541 = vrot.lane.b32.xlu0 %v528, 68
    %v542 = vpop.permute.xlu0 %541
    %v545 = vsel %vm281, %v333, %v532
    %v546 = vsel %vm281, %v334, %v534
    %vm547 = vcmask 556032
    %v548 = vsel %vm547, %v545, %v540
    %v549 = vsel %vm547, %v546, %v542
    %vm550 = vcmask 564224
    %v551 = vsel %vm550, %v548, %v479
    %v552 = vsel %vm550, %v549, %v480
    %vm553 = vcmask 572416
    %v554 = vsel %vm553, %v551, 0.0
    %v555 = vsel %vm553, %v552, 0.0
    %556 = vst [vmem:[#allocation5] sm:$0xff] %v554
    %557 = vst [vmem:[#allocation5 + $0x8] sm:$0xff] %v555
    // Predicated region
    $region22: #{tpu_custom_call.1} parent=1 // pred_check
      _
    $region23: #{tpu_custom_call.1} parent=1 // pred_check_branch
      %559 = sbr.rel (0) target = $region25
    $region24: #{tpu_custom_call.1} parent=1 // pred_region
      %561 = vsyncadd [#allocation4], 0
      %s562 = sshll.u32 [#allocation5], 4
      %s563 = int_to_ptr.vmem [resolvable:$true] %s562
      %s564 = sshll.u32 %s4, 4
      %s565 = int_to_ptr.hbm [resolvable:$true] %s564
      %570 = dma.vmem_to_hbm [thread:$0]  %s563, 256, %s565, [#allocation4], 128, 128, 8
    $region25: #{tpu_custom_call.1} parent=1 // pred_fallthru
      _
    // Predicated region
    $region26: #{tpu_custom_call.1} parent=1 // pred_check
      _
    $region27: #{tpu_custom_call.1} parent=1 // pred_check_branch
      %572 = sbr.rel (0) target = $region29
    $region28: #{tpu_custom_call.1} parent=1 // pred_region
      %574 = dma.done [#allocation4], 256
    $region29: #{tpu_custom_call.1} parent=1 // pred_fallthru
      _
    %575 = vsyncpa [#allocation3], 1
    %576 = vsyncpa [#allocation4], 1

</llo_original>
